<compile_context>
chip_gen: v6e
topology: v6e:2x2x1
jax: 0.10.0
libtpu: 0.0.40
codegen_flags: <defaults>
</compile_context>

<pallas_src>
import functools

import jax
import jax.numpy as jnp
from jax.experimental import pallas as pl
from jax.experimental.pallas import tpu as pltpu


def drmm_hist_kernel(qmask_ref, dtok_ref, sim_ref, o_ref, *, nbins):
    # Block shapes:
    #   qmask_ref: (BB, R, 1)  float32   (R = CHANNELS * QLEN, per-row query mask)
    #   dtok_ref : (BB, 1, D)  int32
    #   sim_ref  : (BB, R, D)  float32
    #   o_ref    : (BB, R, NBINS) float32
    dvalid = dtok_ref[...] != -1                                   # (BB, 1, D) bool

    sim = sim_ref[...]                                             # (BB, R, D)
    # Matches torch: ((simmat + 1.000001) / 2.0 * (bins - 1)).int()
    # (astype(int32) truncates toward zero like torch .int()).
    v = (sim + 1.000001) / 2.0 * (nbins - 1)
    bin_ids = v.astype(jnp.int32)                                  # (BB, R, D)

    # Fold the doc-side padding mask in once: padded doc positions get an
    # out-of-range id and never contribute to any bucket.
    bin_ids = jnp.where(dvalid, bin_ids, -1)                       # (BB, R, D)

    # Per-bucket bool-sum over D (int32 accumulation, no per-bucket f32
    # converts over the big tile).  nbins is small and static.
    cols = []
    for b in range(nbins):
        cols.append(jnp.sum(bin_ids == b, axis=-1, keepdims=True))  # (BB, R, 1) int32

    hist = jnp.concatenate(cols, axis=-1).astype(jnp.float32)      # (BB, R, NBINS)

    # Query mask, epsilon and log applied once on the tiny histogram tile,
    # then a single lane-dense store.
    o_ref[...] = jnp.log(hist * qmask_ref[...] + 1e-5).astype(o_ref.dtype)


def _pick_batch_block(batch, per_batch_bytes, budget_bytes=12 << 20):
    """Largest divisor of `batch` that fits the VMEM budget and keeps >= 2
    grid steps whenever batch >= 2 (so the parallel batch axis can be split
    across the two v7x TensorCores)."""
    cap = max(1, budget_bytes // max(1, per_batch_bytes))
    if batch >= 2:
        cap = min(cap, batch // 2)
    cap = max(1, min(cap, batch))
    for bb in range(cap, 0, -1):
        if batch % bb == 0:
            return bb
    return 1


def drmm_log_count_histogram(simmat, dtoks, qtoks, nbins):
    """simmat: (BATCH, CHANNELS, QLEN, DLEN) float32,
    dtoks: (BATCH, DLEN) int, qtoks: (BATCH, QLEN) int.
    Returns (BATCH, CHANNELS, QLEN, nbins) float32 = log(hist + 1e-5)."""
    BATCH, CHANNELS, QLEN, DLEN = simmat.shape
    R = CHANNELS * QLEN

    # Flatten (C, Q) -> R (free, contiguous reshape).
    sim_r = simmat.reshape(BATCH, R, DLEN)
    d_r = dtoks.reshape(BATCH, 1, DLEN).astype(jnp.int32)
    # Per-row query mask, tiled over channels: row r = c*QLEN + q -> mask[q].
    qmask_rows = jnp.tile((qtoks != -1).astype(jnp.float32),
                          (1, CHANNELS)).reshape(BATCH, R, 1)

    # Double-buffered VMEM bytes per batch element (sim + out + masks).
    per_batch_bytes = 2 * (R * DLEN * 4 + R * nbins * 4 + R * 4 + DLEN * 4)
    BB = _pick_batch_block(BATCH, per_batch_bytes)
    grid = (BATCH // BB,)

    kernel = functools.partial(drmm_hist_kernel, nbins=nbins)

    out = pl.pallas_call(
        kernel,
        out_shape=jax.ShapeDtypeStruct((BATCH, R, nbins), jnp.float32),
        grid_spec=pltpu.PrefetchScalarGridSpec(
            num_scalar_prefetch=0,
            grid=grid,
            in_specs=[
                pl.BlockSpec((BB, R, 1), lambda b: (b, 0, 0)),      # qmask rows
                pl.BlockSpec((BB, 1, DLEN), lambda b: (b, 0, 0)),   # dtoks
                pl.BlockSpec((BB, R, DLEN), lambda b: (b, 0, 0)),   # simmat
            ],
            out_specs=pl.BlockSpec((BB, R, nbins), lambda b: (b, 0, 0)),
        ),
        compiler_params=pltpu.CompilerParams(
            dimension_semantics=("parallel",)),
    )(qmask_rows, d_r, sim_r)

    return out.reshape(BATCH, CHANNELS, QLEN, nbins)


def drmm_ref(simmat, dtoks, qtoks, nbins):
    """Pure-JAX reference mirroring the PyTorch forward."""
    bin_ids = ((simmat + 1.000001) / 2.0 * (nbins - 1)).astype(jnp.int32)  # (B,C,Q,D)
    w = ((qtoks != -1)[:, :, None] & (dtoks != -1)[:, None, :]).astype(jnp.float32)  # (B,Q,D)
    onehot = (bin_ids[..., None] == jnp.arange(nbins)).astype(jnp.float32)  # (B,C,Q,D,N)
    hist = jnp.einsum('bqd,bcqdn->bcqn', w, onehot)                         # (B,C,Q,N)
    return jnp.log(hist + 1e-5)


if __name__ == "__main__":
    key = jax.random.PRNGKey(0)
    k1, k2, k3 = jax.random.split(key, 3)

    BATCH, CHANNELS, QLEN, DLEN, NBINS = 2, 4, 8, 16, 11

    # Cosine-similarity-like values in [-1, 1).
    simmat = jax.random.uniform(k1, (BATCH, CHANNELS, QLEN, DLEN),
                                minval=-1.0, maxval=1.0, dtype=jnp.float32)
    # Token ids in [-1, 5): some entries equal the padding value (-1).
    qtoks = jax.random.randint(k2, (BATCH, QLEN), minval=-1, maxval=5,
                               dtype=jnp.int32)
    dtoks = jax.random.randint(k3, (BATCH, DLEN), minval=-1, maxval=5,
                               dtype=jnp.int32)

    out = drmm_log_count_histogram(simmat, dtoks, qtoks, NBINS)
    out = jax.block_until_ready(out)

    ref = drmm_ref(simmat, dtoks, qtoks, NBINS)
    assert out.shape == (BATCH, CHANNELS, QLEN, NBINS), out.shape
    assert jnp.allclose(out, ref, atol=1e-5, rtol=1e-5), \
        float(jnp.max(jnp.abs(out - ref)))

    print("KERNEL_OK")
</pallas_src>

<mosaic_0001>
module attributes {stable_mosaic.version = 11 : i64} {
  func.func @drmm_hist_kernel(%arg0: i32, %arg1: memref<1x32x1xf32, #tpu.memory_space<vmem>>, %arg2: memref<1x1x16xi32, #tpu.memory_space<vmem>>, %arg3: memref<1x32x16xf32, #tpu.memory_space<vmem>>, %arg4: memref<1x32x11xf32, #tpu.memory_space<vmem>>) attributes {dimension_semantics = [#tpu.dimension_semantics<parallel>], iteration_bounds = array<i64: 2>, scalar_prefetch = 0 : i64, scratch_operands = 0 : i64, tpu.core_type = #tpu.core_type<tc>, window_params = [{transform_indices = @transform_0, window_bounds = array<i64: 1, 32, 1>}, {transform_indices = @transform_1, window_bounds = array<i64: 1, 1, 16>}, {transform_indices = @transform_2, window_bounds = array<i64: 1, 32, 16>}, {transform_indices = @transform_3, window_bounds = array<i64: 1, 32, 11>}]} {
    %c0 = arith.constant 0 : index
    %c0_0 = arith.constant 0 : index
    %c0_1 = arith.constant 0 : index
    %0 = vector.load %arg2[%c0, %c0_0, %c0_1] : memref<1x1x16xi32, #tpu.memory_space<vmem>>, vector<1x1x16xi32>
    %c-1_i32 = arith.constant -1 : i32
    %1 = vector.broadcast %c-1_i32 : i32 to vector<1x1x16xi32>
    %2 = arith.cmpi ne, %0, %1 : vector<1x1x16xi32>
    %c0_2 = arith.constant 0 : index
    %c0_3 = arith.constant 0 : index
    %c0_4 = arith.constant 0 : index
    %3 = vector.load %arg3[%c0_2, %c0_3, %c0_4] : memref<1x32x16xf32, #tpu.memory_space<vmem>>, vector<1x32x16xf32>
    %cst = arith.constant 1.00000095 : f32
    %4 = vector.broadcast %cst : f32 to vector<1x32x16xf32>
    %5 = arith.addf %3, %4 : vector<1x32x16xf32>
    %cst_5 = arith.constant 2.000000e+00 : f32
    %6 = vector.broadcast %cst_5 : f32 to vector<1x32x16xf32>
    %7 = arith.divf %5, %6 : vector<1x32x16xf32>
    %cst_6 = arith.constant 1.000000e+01 : f32
    %8 = vector.broadcast %cst_6 : f32 to vector<1x32x16xf32>
    %9 = arith.mulf %7, %8 : vector<1x32x16xf32>
    %10 = arith.fptosi %9 : vector<1x32x16xf32> to vector<1x32x16xi32>
    %c-1_i32_7 = arith.constant -1 : i32
    %11 = vector.shape_cast %2 : vector<1x1x16xi1> to vector<1x1x16xi1>
    %12 = vector.broadcast %11 : vector<1x1x16xi1> to vector<1x32x16xi1>
    %13 = vector.broadcast %c-1_i32_7 : i32 to vector<1x32x16xi32>
    %14 = arith.select %12, %10, %13 : vector<1x32x16xi1>, vector<1x32x16xi32>
    %c0_i32 = arith.constant 0 : i32
    %15 = vector.broadcast %c0_i32 : i32 to vector<1x32x16xi32>
    %16 = arith.cmpi eq, %14, %15 : vector<1x32x16xi32>
    %17 = arith.extui %16 : vector<1x32x16xi1> to vector<1x32x16xi32>
    %cst_8 = arith.constant dense<0> : vector<1x32xi32>
    %18 = vector.multi_reduction <add>, %17, %cst_8 [2] : vector<1x32x16xi32> to vector<1x32xi32>
    %19 = vector.shape_cast %18 : vector<1x32xi32> to vector<1x32x1xi32>
    %c1_i32 = arith.constant 1 : i32
    %20 = vector.broadcast %c1_i32 : i32 to vector<1x32x16xi32>
    %21 = arith.cmpi eq, %14, %20 : vector<1x32x16xi32>
    %22 = arith.extui %21 : vector<1x32x16xi1> to vector<1x32x16xi32>
    %cst_9 = arith.constant dense<0> : vector<1x32xi32>
    %23 = vector.multi_reduction <add>, %22, %cst_9 [2] : vector<1x32x16xi32> to vector<1x32xi32>
    %24 = vector.shape_cast %23 : vector<1x32xi32> to vector<1x32x1xi32>
    %c2_i32 = arith.constant 2 : i32
    %25 = vector.broadcast %c2_i32 : i32 to vector<1x32x16xi32>
    %26 = arith.cmpi eq, %14, %25 : vector<1x32x16xi32>
    %27 = arith.extui %26 : vector<1x32x16xi1> to vector<1x32x16xi32>
    %cst_10 = arith.constant dense<0> : vector<1x32xi32>
    %28 = vector.multi_reduction <add>, %27, %cst_10 [2] : vector<1x32x16xi32> to vector<1x32xi32>
    %29 = vector.shape_cast %28 : vector<1x32xi32> to vector<1x32x1xi32>
    %c3_i32 = arith.constant 3 : i32
    %30 = vector.broadcast %c3_i32 : i32 to vector<1x32x16xi32>
    %31 = arith.cmpi eq, %14, %30 : vector<1x32x16xi32>
    %32 = arith.extui %31 : vector<1x32x16xi1> to vector<1x32x16xi32>
    %cst_11 = arith.constant dense<0> : vector<1x32xi32>
    %33 = vector.multi_reduction <add>, %32, %cst_11 [2] : vector<1x32x16xi32> to vector<1x32xi32>
    %34 = vector.shape_cast %33 : vector<1x32xi32> to vector<1x32x1xi32>
    %c4_i32 = arith.constant 4 : i32
    %35 = vector.broadcast %c4_i32 : i32 to vector<1x32x16xi32>
    %36 = arith.cmpi eq, %14, %35 : vector<1x32x16xi32>
    %37 = arith.extui %36 : vector<1x32x16xi1> to vector<1x32x16xi32>
    %cst_12 = arith.constant dense<0> : vector<1x32xi32>
    %38 = vector.multi_reduction <add>, %37, %cst_12 [2] : vector<1x32x16xi32> to vector<1x32xi32>
    %39 = vector.shape_cast %38 : vector<1x32xi32> to vector<1x32x1xi32>
    %c5_i32 = arith.constant 5 : i32
    %40 = vector.broadcast %c5_i32 : i32 to vector<1x32x16xi32>
    %41 = arith.cmpi eq, %14, %40 : vector<1x32x16xi32>
    %42 = arith.extui %41 : vector<1x32x16xi1> to vector<1x32x16xi32>
    %cst_13 = arith.constant dense<0> : vector<1x32xi32>
    %43 = vector.multi_reduction <add>, %42, %cst_13 [2] : vector<1x32x16xi32> to vector<1x32xi32>
    %44 = vector.shape_cast %43 : vector<1x32xi32> to vector<1x32x1xi32>
    %c6_i32 = arith.constant 6 : i32
    %45 = vector.broadcast %c6_i32 : i32 to vector<1x32x16xi32>
    %46 = arith.cmpi eq, %14, %45 : vector<1x32x16xi32>
    %47 = arith.extui %46 : vector<1x32x16xi1> to vector<1x32x16xi32>
    %cst_14 = arith.constant dense<0> : vector<1x32xi32>
    %48 = vector.multi_reduction <add>, %47, %cst_14 [2] : vector<1x32x16xi32> to vector<1x32xi32>
    %49 = vector.shape_cast %48 : vector<1x32xi32> to vector<1x32x1xi32>
    %c7_i32 = arith.constant 7 : i32
    %50 = vector.broadcast %c7_i32 : i32 to vector<1x32x16xi32>
    %51 = arith.cmpi eq, %14, %50 : vector<1x32x16xi32>
    %52 = arith.extui %51 : vector<1x32x16xi1> to vector<1x32x16xi32>
    %cst_15 = arith.constant dense<0> : vector<1x32xi32>
    %53 = vector.multi_reduction <add>, %52, %cst_15 [2] : vector<1x32x16xi32> to vector<1x32xi32>
    %54 = vector.shape_cast %53 : vector<1x32xi32> to vector<1x32x1xi32>
    %c8_i32 = arith.constant 8 : i32
    %55 = vector.broadcast %c8_i32 : i32 to vector<1x32x16xi32>
    %56 = arith.cmpi eq, %14, %55 : vector<1x32x16xi32>
    %57 = arith.extui %56 : vector<1x32x16xi1> to vector<1x32x16xi32>
    %cst_16 = arith.constant dense<0> : vector<1x32xi32>
    %58 = vector.multi_reduction <add>, %57, %cst_16 [2] : vector<1x32x16xi32> to vector<1x32xi32>
    %59 = vector.shape_cast %58 : vector<1x32xi32> to vector<1x32x1xi32>
    %c9_i32 = arith.constant 9 : i32
    %60 = vector.broadcast %c9_i32 : i32 to vector<1x32x16xi32>
    %61 = arith.cmpi eq, %14, %60 : vector<1x32x16xi32>
    %62 = arith.extui %61 : vector<1x32x16xi1> to vector<1x32x16xi32>
    %cst_17 = arith.constant dense<0> : vector<1x32xi32>
    %63 = vector.multi_reduction <add>, %62, %cst_17 [2] : vector<1x32x16xi32> to vector<1x32xi32>
    %64 = vector.shape_cast %63 : vector<1x32xi32> to vector<1x32x1xi32>
    %c10_i32 = arith.constant 10 : i32
    %65 = vector.broadcast %c10_i32 : i32 to vector<1x32x16xi32>
    %66 = arith.cmpi eq, %14, %65 : vector<1x32x16xi32>
    %67 = arith.extui %66 : vector<1x32x16xi1> to vector<1x32x16xi32>
    %cst_18 = arith.constant dense<0> : vector<1x32xi32>
    %68 = vector.multi_reduction <add>, %67, %cst_18 [2] : vector<1x32x16xi32> to vector<1x32xi32>
    %69 = vector.shape_cast %68 : vector<1x32xi32> to vector<1x32x1xi32>
    %70 = tpu.concatenate %19, %24, %29, %34, %39, %44, %49, %54, %59, %64, %69 in 2 : vector<1x32x1xi32>, vector<1x32x1xi32>, vector<1x32x1xi32>, vector<1x32x1xi32>, vector<1x32x1xi32>, vector<1x32x1xi32>, vector<1x32x1xi32>, vector<1x32x1xi32>, vector<1x32x1xi32>, vector<1x32x1xi32>, vector<1x32x1xi32> -> vector<1x32x11xi32>
    %71 = arith.sitofp %70 : vector<1x32x11xi32> to vector<1x32x11xf32>
    %c0_19 = arith.constant 0 : index
    %c0_20 = arith.constant 0 : index
    %c0_21 = arith.constant 0 : index
    %72 = vector.load %arg1[%c0_19, %c0_20, %c0_21] : memref<1x32x1xf32, #tpu.memory_space<vmem>>, vector<1x32x1xf32>
    %73 = vector.broadcast %72 : vector<1x32x1xf32> to vector<1x32x11xf32>
    %74 = arith.mulf %71, %73 : vector<1x32x11xf32>
    %cst_22 = arith.constant 9.99999974E-6 : f32
    %75 = vector.broadcast %cst_22 : f32 to vector<1x32x11xf32>
    %76 = arith.addf %74, %75 : vector<1x32x11xf32>
    %77 = math.log %76 : vector<1x32x11xf32>
    %c0_23 = arith.constant 0 : index
    %c0_24 = arith.constant 0 : index
    %c0_25 = arith.constant 0 : index
    %78 = vector.load %arg4[%c0_23, %c0_24, %c0_25] : memref<1x32x11xf32, #tpu.memory_space<vmem>>, vector<1x32x11xf32>
    tpu.vector_store %arg4[%c0_23, %c0_24, %c0_25], %77 {strides = array<i32>} : memref<1x32x11xf32, #tpu.memory_space<vmem>>, vector<1x32x11xf32>,
    return
  }
  func.func @transform_0(%arg0: i32) -> (i32, i32, i32) {
    %c0_i32 = arith.constant 0 : i32
    %c0_i32_0 = arith.constant 0 : i32
    %c0_i32_1 = arith.constant 0 : i32
    return %arg0, %c0_i32, %c0_i32_0 : i32, i32, i32
  }
  func.func @transform_1(%arg0: i32) -> (i32, i32, i32) {
    %c0_i32 = arith.constant 0 : i32
    %c0_i32_0 = arith.constant 0 : i32
    %c0_i32_1 = arith.constant 0 : i32
    return %arg0, %c0_i32, %c0_i32_0 : i32, i32, i32
  }
  func.func @transform_2(%arg0: i32) -> (i32, i32, i32) {
    %c0_i32 = arith.constant 0 : i32
    %c0_i32_0 = arith.constant 0 : i32
    %c0_i32_1 = arith.constant 0 : i32
    return %arg0, %c0_i32, %c0_i32_0 : i32, i32, i32
  }
  func.func @transform_3(%arg0: i32) -> (i32, i32, i32) {
    %c0_i32 = arith.constant 0 : i32
    %c0_i32_0 = arith.constant 0 : i32
    %c0_i32_1 = arith.constant 0 : i32
    return %arg0, %c0_i32, %c0_i32_0 : i32, i32, i32
  }
}

</mosaic_0001>

<llo_original>
// kernel: tpu_custom_call.1
$region0: #{tpu_custom_call.1}
  #allocation0 [shape = 'u32[]', space=smem, size = 0x4, offset = 0x4, fixed_abs, tag = 'smem constant byte address 0x4 - core index']
  #allocation1 [shape = 'u32[144,128]{1,0:T(1,128)}', space=vmem, size = 0x12000, scoped, tag = 'internal scratch']
  %s0 = inlined_call_operand.vmem [shape: f32[2,32,1], index: 0, kind: input, shape index: {}]
  %s1 = inlined_call_operand.vmem [shape: s32[2,1,16], index: 1, kind: input, shape index: {}]
  %s2 = inlined_call_operand.vmem [shape: f32[2,32,16], index: 2, kind: input, shape index: {}]
  %s3 = inlined_call_operand.vmem [shape: f32[2,32,11], index: 3, kind: output, shape index: {}]
  %s4 = sld [smem:[#allocation0]]
  $region45: #{tpu_custom_call.1} parent=0
    _
  %s6 = ssub.s32 1, %s4
  %s7 = scalar_select 0, %s6, %s4
  loop: start=0, step=1, limit=4
  $region2: #{tpu_custom_call.1} parent=0 // loop_pre_header
    _
  $region3: #{tpu_custom_call.1} parent=0 // loop_header
    %s9 = sphi 0, %s13
    %p10 = scmp.ge.s32.totalorder %s9, 4
    %s19 = sphi 0, %s21
    %s22 = sphi 0, %s19
    %s23 = sphi 0, %s22
    %s39 = sphi 0, %s23
    %s45 = sphi 0, %s47
    %s48 = sphi 0, %s45
    %s49 = sphi 0, %s48
    %s65 = sphi 0, %s49
    %s71 = sphi 0, %s73
    %s74 = sphi 0, %s71
    %s75 = sphi 0, %s74
    %s91 = sphi 0, %s75
    %s97 = sphi 0, %s99
    %s100 = sphi 0, %s97
    %s101 = sphi 0, %s100
    %s117 = sphi 0, %s101
  $region4: #{tpu_custom_call.1} parent=0 // loop_header_branch
    %12 = sbr.rel (%p10) target = $region8
  $region5: #{tpu_custom_call.1} parent=0 // loop_body
    %s14 = ssub.s32 %s9, 1
    %s15 = ssub.s32 %s9, 2
    %s16 = sadd.s32 %s9, 1
    %s17 = ssub.s32 %s9, %s16
    %p18 = scmp.eq.s32.totalorder %s17, 0
    %s20 = sadd.s32 %s19, 1
    %s21 = scalar_select %p18, %s19, %s20
    %p24 = pneg %p18
    %p25 = scmp.eq.s32.totalorder %s9, 1
    %p26 = por %p24, %p25
    %p27 = scmp.ne.s32.totalorder %s19, %s22
    %p28 = scmp.eq.s32.totalorder %s9, 0
    %p29 = por %p27, %p28
    %p30 = scmp.ne.s32.totalorder %s19, %s22
    %p31 = scmp.eq.s32.totalorder %s14, 1
    %p32 = por %p30, %p31
    %p33 = scmp.ne.s32.totalorder %s22, %s23
    %p34 = scmp.eq.s32.totalorder %s14, 0
    %p35 = por %p33, %p34
    %p36 = scmp.ne.s32.totalorder %s22, %s23
    %p37 = scmp.eq.s32.totalorder %s15, 1
    %p38 = por %p36, %p37
    %p40 = scmp.ne.s32.totalorder %s23, %s39
    %p41 = scmp.eq.s32.totalorder %s15, 0
    %p42 = por %p40, %p41
    %s43 = ssub.s32 %s9, %s16
    %p44 = scmp.eq.s32.totalorder %s43, 0
    %s46 = sadd.s32 %s45, 1
    %s47 = scalar_select %p44, %s45, %s46
    %p50 = pneg %p44
    %p51 = scmp.eq.s32.totalorder %s9, 1
    %p52 = por %p50, %p51
    %p53 = scmp.ne.s32.totalorder %s45, %s48
    %p54 = scmp.eq.s32.totalorder %s9, 0
    %p55 = por %p53, %p54
    %p56 = scmp.ne.s32.totalorder %s45, %s48
    %p57 = scmp.eq.s32.totalorder %s14, 1
    %p58 = por %p56, %p57
    %p59 = scmp.ne.s32.totalorder %s48, %s49
    %p60 = scmp.eq.s32.totalorder %s14, 0
    %p61 = por %p59, %p60
    %p62 = scmp.ne.s32.totalorder %s48, %s49
    %p63 = scmp.eq.s32.totalorder %s15, 1
    %p64 = por %p62, %p63
    %p66 = scmp.ne.s32.totalorder %s49, %s65
    %p67 = scmp.eq.s32.totalorder %s15, 0
    %p68 = por %p66, %p67
    %s69 = ssub.s32 %s9, %s16
    %p70 = scmp.eq.s32.totalorder %s69, 0
    %s72 = sadd.s32 %s71, 1
    %s73 = scalar_select %p70, %s71, %s72
    %p76 = pneg %p70
    %p77 = scmp.eq.s32.totalorder %s9, 1
    %p78 = por %p76, %p77
    %p79 = scmp.ne.s32.totalorder %s71, %s74
    %p80 = scmp.eq.s32.totalorder %s9, 0
    %p81 = por %p79, %p80
    %p82 = scmp.ne.s32.totalorder %s71, %s74
    %p83 = scmp.eq.s32.totalorder %s14, 1
    %p84 = por %p82, %p83
    %p85 = scmp.ne.s32.totalorder %s74, %s75
    %p86 = scmp.eq.s32.totalorder %s14, 0
    %p87 = por %p85, %p86
    %p88 = scmp.ne.s32.totalorder %s74, %s75
    %p89 = scmp.eq.s32.totalorder %s15, 1
    %p90 = por %p88, %p89
    %p92 = scmp.ne.s32.totalorder %s75, %s91
    %p93 = scmp.eq.s32.totalorder %s15, 0
    %p94 = por %p92, %p93
    %s95 = ssub.s32 %s9, %s16
    %p96 = scmp.eq.s32.totalorder %s95, 0
    %s98 = sadd.s32 %s97, 1
    %s99 = scalar_select %p96, %s97, %s98
    %p102 = pneg %p96
    %p103 = scmp.eq.s32.totalorder %s9, 1
    %p104 = por %p102, %p103
    %p105 = scmp.ne.s32.totalorder %s97, %s100
    %p106 = scmp.eq.s32.totalorder %s9, 0
    %p107 = por %p105, %p106
    %p108 = scmp.ne.s32.totalorder %s97, %s100
    %p109 = scmp.eq.s32.totalorder %s14, 1
    %p110 = por %p108, %p109
    %p111 = scmp.ne.s32.totalorder %s100, %s101
    %p112 = scmp.eq.s32.totalorder %s14, 0
    %p113 = por %p111, %p112
    %p114 = scmp.ne.s32.totalorder %s100, %s101
    %p115 = scmp.eq.s32.totalorder %s15, 1
    %p116 = por %p114, %p115
    %p118 = scmp.ne.s32.totalorder %s101, %s117
    %p119 = scmp.eq.s32.totalorder %s15, 0
    %p120 = por %p118, %p119
    %p121 = scmp.le.s32.totalorder 1, %s9
    %p122 = scmp.lt.s32.totalorder %s9, 3
    %p123 = pnand %p121, %p122
    %p124 = pneg %p123
    // Predicated region
    $region9: #{tpu_custom_call.1} parent=5 // pred_check
      _
    $region10: #{tpu_custom_call.1} parent=5 // pred_check_branch
      %126 = sbr.rel (%p123) target = $region12
    $region11: #{tpu_custom_call.1} parent=5 // pred_region
      %s127 = ssub.s32 %s9, 1
    $region12: #{tpu_custom_call.1} parent=5 // pred_fallthru
      _
    %p128 = scmp.lt.s32.totalorder %s9, 2
    // Predicated region
    $region13: #{tpu_custom_call.1} parent=5 // pred_check
      %p129 = pneg %p128
    $region14: #{tpu_custom_call.1} parent=5 // pred_check_branch
      %131 = sbr.rel (%p129) target = $region16
    $region15: #{tpu_custom_call.1} parent=5 // pred_region
      // Predicated region
      $region17: #{tpu_custom_call.1} parent=15 // pred_check
        %p132 = pneg %p29
      $region18: #{tpu_custom_call.1} parent=15 // pred_check_branch
        %134 = sbr.rel (%p132) target = $region20
      $region19: #{tpu_custom_call.1} parent=15 // pred_region
        %p135 = scmp.lt.s32.totalorder %s9, 1
        %s136 = scalar_select %p135, %s9, 1
        %s137 = smul.addr %s136, 4
        %s138 = smul.addr %s137, 8
        %s139 = scalar_lea.vmem %s0, %s138
      $region20: #{tpu_custom_call.1} parent=15 // pred_fallthru
        _
      // Predicated region
      $region21: #{tpu_custom_call.1} parent=15 // pred_check
        %p140 = pneg %p55
      $region22: #{tpu_custom_call.1} parent=15 // pred_check_branch
        %142 = sbr.rel (%p140) target = $region24
      $region23: #{tpu_custom_call.1} parent=15 // pred_region
        %p143 = scmp.lt.s32.totalorder %s9, 1
        %s144 = scalar_select %p143, %s9, 1
        %s145 = scalar_lea.vmem %s1, %s144
      $region24: #{tpu_custom_call.1} parent=15 // pred_fallthru
        _
      // Predicated region
      $region25: #{tpu_custom_call.1} parent=15 // pred_check
        %p146 = pneg %p81
      $region26: #{tpu_custom_call.1} parent=15 // pred_check_branch
        %148 = sbr.rel (%p146) target = $region28
      $region27: #{tpu_custom_call.1} parent=15 // pred_region
        %p149 = scmp.lt.s32.totalorder %s9, 1
        %s150 = scalar_select %p149, %s9, 1
        %s151 = smul.addr %s150, 4
        %s152 = smul.addr %s151, 8
        %s153 = scalar_lea.vmem %s2, %s152
      $region28: #{tpu_custom_call.1} parent=15 // pred_fallthru
        _
    $region16: #{tpu_custom_call.1} parent=5 // pred_fallthru
      _
    %p154 = scmp.le.s32.totalorder 1, %s9
    %p155 = scmp.lt.s32.totalorder %s9, 3
    %p156 = pnand %p154, %p155
    %p157 = pneg %p156
    // Predicated region
    $region29: #{tpu_custom_call.1} parent=5 // pred_check
      _
    $region30: #{tpu_custom_call.1} parent=5 // pred_check_branch
      %159 = sbr.rel (%p156) target = $region32
    $region31: #{tpu_custom_call.1} parent=5 // pred_region
      %s160 = ssub.s32 %s9, 1
      %p161 = scmp.lt.s32.totalorder %s14, 1
      %s162 = scalar_select %p161, %s14, 1
      %s163 = smul.addr %s162, 4
      %s164 = smul.addr %s163, 8
      %s165 = scalar_lea.vmem %s0, %s164
      %p166 = pneg %p35
      %p167 = pneg %p32
      %p168 = scmp.lt.s32.totalorder %s14, 1
      %s169 = scalar_select %p168, %s14, 1
      %s170 = scalar_lea.vmem %s1, %s169
      %p171 = pneg %p61
      %p172 = pneg %p58
      %p173 = scmp.lt.s32.totalorder %s14, 1
      %s174 = scalar_select %p173, %s14, 1
      %s175 = smul.addr %s174, 4
      %s176 = smul.addr %s175, 8
      %s177 = scalar_lea.vmem %s2, %s176
      %p178 = pneg %p87
      %p179 = pneg %p84
      %p180 = pneg %p113
      %p181 = pneg %p110
      %p182 = scmp.lt.s32.totalorder %s14, 1
      %s183 = scalar_select %p182, %s14, 1
      %s184 = smul.addr %s183, 4
      %s185 = smul.addr %s184, 8
      %s186 = scalar_lea.vmem %s3, %s185
      %p187 = scmp.lt.s32.totalorder %s14, 1
      %s188 = scalar_select %p187, %s14, 1
      %s189 = smul.addr %s188, 4
      %s190 = smul.addr %s189, 8
      %s191 = scalar_lea.vmem %s0, %s190
      %p192 = scmp.lt.s32.totalorder %s14, 1
      %s193 = scalar_select %p192, %s14, 1
      %s194 = scalar_lea.vmem %s1, %s193
      %p195 = scmp.lt.s32.totalorder %s14, 1
      %s196 = scalar_select %p195, %s14, 1
      %s197 = smul.addr %s196, 4
      %s198 = smul.addr %s197, 8
      %s199 = scalar_lea.vmem %s2, %s198
      %p200 = scmp.lt.s32.totalorder %s14, 1
      %s201 = scalar_select %p200, %s14, 1
      %s202 = smul.addr %s201, 4
      %s203 = smul.addr %s202, 8
      %s204 = scalar_lea.vmem %s3, %s203
      %v205 = vld [vmem:[%s194] sm:$0x1]
      %vm206 = vcmp.ne.s32.totalorder %v205, 4294967295
      %v207 = vld [vmem:[%s199] sm:$0xff]
      %v208 = vld [vmem:[%s199 + $0x8] sm:$0xff]
      %v209 = vld [vmem:[%s199 + $0x10] sm:$0xff]
      %v210 = vld [vmem:[%s199 + $0x18] sm:$0xff]
      %v211 = vadd.f32 %v207, 1.000001
      %v212 = vadd.f32 %v208, 1.000001
      %v213 = vadd.f32 %v209, 1.000001
      %v214 = vadd.f32 %v210, 1.000001
      %v215 = vrcp.pop 2.0
      %v216 = vmul.f32 %v211, %v215
      %v217 = vmul.f32 %v212, %v215
      %v218 = vmul.f32 %v213, %v215
      %v219 = vmul.f32 %v214, %v215
      %v220 = vmul.f32 %v216, 10.0
      %v221 = vmul.f32 %v217, 10.0
      %v222 = vmul.f32 %v218, 10.0
      %v223 = vmul.f32 %v219, 10.0
      %v224 = vcvt.f32.s32.to.zero.pseudo %v220
      %v225 = vcvt.f32.s32.to.zero.pseudo %v221
      %v226 = vcvt.f32.s32.to.zero.pseudo %v222
      %v227 = vcvt.f32.s32.to.zero.pseudo %v223
      %v228 = vsel %vm206, 1, 0
      %v229 = vlaneseq
      %v230 = vshrl.u32 %v229, 7
      %v231 = vsub.s32 0, %v230
      %v232 = vrot.slane %v228, %v231
      %vm233 = vcmp.eq.s32.totalorder %v232, 1
      %v234 = vsel %vm233, %v224, 4294967295
      %v235 = vsel %vm233, %v225, 4294967295
      %v236 = vsel %vm233, %v226, 4294967295
      %v237 = vsel %vm233, %v227, 4294967295
      %vm238 = vcmp.eq.s32.totalorder %v234, 0
      %vm239 = vcmp.eq.s32.totalorder %v235, 0
      %vm240 = vcmp.eq.s32.totalorder %v236, 0
      %vm241 = vcmp.eq.s32.totalorder %v237, 0
      %v242 = vsel %vm238, 1, 0
      %v243 = vsel %vm239, 1, 0
      %v244 = vsel %vm240, 1, 0
      %v245 = vsel %vm241, 1, 0
      %vm246 = vcmask 130048
      %v247 = vsel %vm246, %v242, 0
      %v248 = vand.u32 %v247, 65535
      %v249 = vshrl.u32 %v247, 16
      %v250 = vcvt.s32.f32 %v248
      %v251 = vcvt.s32.f32 %v249
      %252 = vadd.xlane.f32.xlu0 %v250
      %v253 = vpop.xlane.xlu0 %252
      %254 = vadd.xlane.f32.xlu0 %v251
      %v255 = vpop.xlane.xlu0 %254
      %v256 = vcvt.f32.s32 %v253
      %v257 = vcvt.f32.s32 %v255
      %v258 = vshll.u32 %v257, 16
      %v259 = vadd.s32 %v258, %v256
      %v260 = vsel %vm246, %v243, 0
      %v261 = vand.u32 %v260, 65535
      %v262 = vshrl.u32 %v260, 16
      %v263 = vcvt.s32.f32 %v261
      %v264 = vcvt.s32.f32 %v262
      %265 = vadd.xlane.f32.xlu0 %v263
      %v266 = vpop.xlane.xlu0 %265
      %267 = vadd.xlane.f32.xlu0 %v264
      %v268 = vpop.xlane.xlu0 %267
      %v269 = vcvt.f32.s32 %v266
      %v270 = vcvt.f32.s32 %v268
      %v271 = vshll.u32 %v270, 16
      %v272 = vadd.s32 %v271, %v269
      %v273 = vsel %vm246, %v244, 0
      %v274 = vand.u32 %v273, 65535
      %v275 = vshrl.u32 %v273, 16
      %v276 = vcvt.s32.f32 %v274
      %v277 = vcvt.s32.f32 %v275
      %278 = vadd.xlane.f32.xlu0 %v276
      %v279 = vpop.xlane.xlu0 %278
      %280 = vadd.xlane.f32.xlu0 %v277
      %v281 = vpop.xlane.xlu0 %280
      %v282 = vcvt.f32.s32 %v279
      %v283 = vcvt.f32.s32 %v281
      %v284 = vshll.u32 %v283, 16
      %v285 = vadd.s32 %v284, %v282
      %v286 = vsel %vm246, %v245, 0
      %v287 = vand.u32 %v286, 65535
      %v288 = vshrl.u32 %v286, 16
      %v289 = vcvt.s32.f32 %v287
      %v290 = vcvt.s32.f32 %v288
      %291 = vadd.xlane.f32.xlu0 %v289
      %v292 = vpop.xlane.xlu0 %291
      %293 = vadd.xlane.f32.xlu0 %v290
      %v294 = vpop.xlane.xlu0 %293
      %v295 = vcvt.f32.s32 %v292
      %v296 = vcvt.f32.s32 %v294
      %v297 = vshll.u32 %v296, 16
      %v298 = vadd.s32 %v297, %v295
      %vm299 = vcmp.eq.s32.totalorder %v234, 1
      %vm300 = vcmp.eq.s32.totalorder %v235, 1
      %vm301 = vcmp.eq.s32.totalorder %v236, 1
      %vm302 = vcmp.eq.s32.totalorder %v237, 1
      %v303 = vsel %vm299, 1, 0
      %v304 = vsel %vm300, 1, 0
      %v305 = vsel %vm301, 1, 0
      %v306 = vsel %vm302, 1, 0
      %v307 = vsel %vm246, %v303, 0
      %v308 = vand.u32 %v307, 65535
      %v309 = vshrl.u32 %v307, 16
      %v310 = vcvt.s32.f32 %v308
      %v311 = vcvt.s32.f32 %v309
      %312 = vadd.xlane.f32.xlu0 %v310
      %v313 = vpop.xlane.xlu0 %312
      %314 = vadd.xlane.f32.xlu0 %v311
      %v315 = vpop.xlane.xlu0 %314
      %v316 = vcvt.f32.s32 %v313
      %v317 = vcvt.f32.s32 %v315
      %v318 = vshll.u32 %v317, 16
      %v319 = vadd.s32 %v318, %v316
      %v320 = vsel %vm246, %v304, 0
      %v321 = vand.u32 %v320, 65535
      %v322 = vshrl.u32 %v320, 16
      %v323 = vcvt.s32.f32 %v321
      %v324 = vcvt.s32.f32 %v322
      %325 = vadd.xlane.f32.xlu0 %v323
      %v326 = vpop.xlane.xlu0 %325
      %327 = vadd.xlane.f32.xlu0 %v324
      %v328 = vpop.xlane.xlu0 %327
      %v329 = vcvt.f32.s32 %v326
      %v330 = vcvt.f32.s32 %v328
      %v331 = vshll.u32 %v330, 16
      %v332 = vadd.s32 %v331, %v329
      %v333 = vsel %vm246, %v305, 0
      %v334 = vand.u32 %v333, 65535
      %v335 = vshrl.u32 %v333, 16
      %v336 = vcvt.s32.f32 %v334
      %v337 = vcvt.s32.f32 %v335
      %338 = vadd.xlane.f32.xlu0 %v336
      %v339 = vpop.xlane.xlu0 %338
      %340 = vadd.xlane.f32.xlu0 %v337
      %v341 = vpop.xlane.xlu0 %340
      %v342 = vcvt.f32.s32 %v339
      %v343 = vcvt.f32.s32 %v341
      %v344 = vshll.u32 %v343, 16
      %v345 = vadd.s32 %v344, %v342
      %v346 = vsel %vm246, %v306, 0
      %v347 = vand.u32 %v346, 65535
      %v348 = vshrl.u32 %v346, 16
      %v349 = vcvt.s32.f32 %v347
      %v350 = vcvt.s32.f32 %v348
      %351 = vadd.xlane.f32.xlu0 %v349
      %v352 = vpop.xlane.xlu0 %351
      %353 = vadd.xlane.f32.xlu0 %v350
      %v354 = vpop.xlane.xlu0 %353
      %v355 = vcvt.f32.s32 %v352
      %v356 = vcvt.f32.s32 %v354
      %v357 = vshll.u32 %v356, 16
      %v358 = vadd.s32 %v357, %v355
      %vm359 = vcmp.eq.s32.totalorder %v234, 2
      %vm360 = vcmp.eq.s32.totalorder %v235, 2
      %vm361 = vcmp.eq.s32.totalorder %v236, 2
      %vm362 = vcmp.eq.s32.totalorder %v237, 2
      %v363 = vsel %vm359, 1, 0
      %v364 = vsel %vm360, 1, 0
      %v365 = vsel %vm361, 1, 0
      %v366 = vsel %vm362, 1, 0
      %v367 = vsel %vm246, %v363, 0
      %v368 = vand.u32 %v367, 65535
      %v369 = vshrl.u32 %v367, 16
      %v370 = vcvt.s32.f32 %v368
      %v371 = vcvt.s32.f32 %v369
      %372 = vadd.xlane.f32.xlu0 %v370
      %v373 = vpop.xlane.xlu0 %372
      %374 = vadd.xlane.f32.xlu0 %v371
      %v375 = vpop.xlane.xlu0 %374
      %v376 = vcvt.f32.s32 %v373
      %v377 = vcvt.f32.s32 %v375
      %v378 = vshll.u32 %v377, 16
      %v379 = vadd.s32 %v378, %v376
      %v380 = vsel %vm246, %v364, 0
      %v381 = vand.u32 %v380, 65535
      %v382 = vshrl.u32 %v380, 16
      %v383 = vcvt.s32.f32 %v381
      %v384 = vcvt.s32.f32 %v382
      %385 = vadd.xlane.f32.xlu0 %v383
      %v386 = vpop.xlane.xlu0 %385
      %387 = vadd.xlane.f32.xlu0 %v384
      %v388 = vpop.xlane.xlu0 %387
      %v389 = vcvt.f32.s32 %v386
      %v390 = vcvt.f32.s32 %v388
      %v391 = vshll.u32 %v390, 16
      %v392 = vadd.s32 %v391, %v389
      %v393 = vsel %vm246, %v365, 0
      %v394 = vand.u32 %v393, 65535
      %v395 = vshrl.u32 %v393, 16
      %v396 = vcvt.s32.f32 %v394
      %v397 = vcvt.s32.f32 %v395
      %398 = vadd.xlane.f32.xlu0 %v396
      %v399 = vpop.xlane.xlu0 %398
      %400 = vadd.xlane.f32.xlu0 %v397
      %v401 = vpop.xlane.xlu0 %400
      %v402 = vcvt.f32.s32 %v399
      %v403 = vcvt.f32.s32 %v401
      %v404 = vshll.u32 %v403, 16
      %v405 = vadd.s32 %v404, %v402
      %v406 = vsel %vm246, %v366, 0
      %v407 = vand.u32 %v406, 65535
      %v408 = vshrl.u32 %v406, 16
      %v409 = vcvt.s32.f32 %v407
      %v410 = vcvt.s32.f32 %v408
      %411 = vadd.xlane.f32.xlu0 %v409
      %v412 = vpop.xlane.xlu0 %411
      %413 = vadd.xlane.f32.xlu0 %v410
      %v414 = vpop.xlane.xlu0 %413
      %v415 = vcvt.f32.s32 %v412
      %v416 = vcvt.f32.s32 %v414
      %v417 = vshll.u32 %v416, 16
      %v418 = vadd.s32 %v417, %v415
      %vm419 = vcmp.eq.s32.totalorder %v234, 3
      %vm420 = vcmp.eq.s32.totalorder %v235, 3
      %vm421 = vcmp.eq.s32.totalorder %v236, 3
      %vm422 = vcmp.eq.s32.totalorder %v237, 3
      %v423 = vsel %vm419, 1, 0
      %v424 = vsel %vm420, 1, 0
      %v425 = vsel %vm421, 1, 0
      %v426 = vsel %vm422, 1, 0
      %v427 = vsel %vm246, %v423, 0
      %v428 = vand.u32 %v427, 65535
      %v429 = vshrl.u32 %v427, 16
      %v430 = vcvt.s32.f32 %v428
      %v431 = vcvt.s32.f32 %v429
      %432 = vadd.xlane.f32.xlu0 %v430
      %v433 = vpop.xlane.xlu0 %432
      %434 = vadd.xlane.f32.xlu0 %v431
      %v435 = vpop.xlane.xlu0 %434
      %v436 = vcvt.f32.s32 %v433
      %v437 = vcvt.f32.s32 %v435
      %v438 = vshll.u32 %v437, 16
      %v439 = vadd.s32 %v438, %v436
      %v440 = vsel %vm246, %v424, 0
      %v441 = vand.u32 %v440, 65535
      %v442 = vshrl.u32 %v440, 16
      %v443 = vcvt.s32.f32 %v441
      %v444 = vcvt.s32.f32 %v442
      %445 = vadd.xlane.f32.xlu0 %v443
      %v446 = vpop.xlane.xlu0 %445
      %447 = vadd.xlane.f32.xlu0 %v444
      %v448 = vpop.xlane.xlu0 %447
      %v449 = vcvt.f32.s32 %v446
      %v450 = vcvt.f32.s32 %v448
      %v451 = vshll.u32 %v450, 16
      %v452 = vadd.s32 %v451, %v449
      %v453 = vsel %vm246, %v425, 0
      %v454 = vand.u32 %v453, 65535
      %v455 = vshrl.u32 %v453, 16
      %v456 = vcvt.s32.f32 %v454
      %v457 = vcvt.s32.f32 %v455
      %458 = vadd.xlane.f32.xlu0 %v456
      %v459 = vpop.xlane.xlu0 %458
      %460 = vadd.xlane.f32.xlu0 %v457
      %v461 = vpop.xlane.xlu0 %460
      %v462 = vcvt.f32.s32 %v459
      %v463 = vcvt.f32.s32 %v461
      %v464 = vshll.u32 %v463, 16
      %v465 = vadd.s32 %v464, %v462
      %v466 = vsel %vm246, %v426, 0
      %v467 = vand.u32 %v466, 65535
      %v468 = vshrl.u32 %v466, 16
      %v469 = vcvt.s32.f32 %v467
      %v470 = vcvt.s32.f32 %v468
      %471 = vadd.xlane.f32.xlu0 %v469
      %v472 = vpop.xlane.xlu0 %471
      %473 = vadd.xlane.f32.xlu0 %v470
      %v474 = vpop.xlane.xlu0 %473
      %v475 = vcvt.f32.s32 %v472
      %v476 = vcvt.f32.s32 %v474
      %v477 = vshll.u32 %v476, 16
      %v478 = vadd.s32 %v477, %v475
      %vm479 = vcmp.eq.s32.totalorder %v234, 4
      %vm480 = vcmp.eq.s32.totalorder %v235, 4
      %vm481 = vcmp.eq.s32.totalorder %v236, 4
      %vm482 = vcmp.eq.s32.totalorder %v237, 4
      %v483 = vsel %vm479, 1, 0
      %v484 = vsel %vm480, 1, 0
      %v485 = vsel %vm481, 1, 0
      %v486 = vsel %vm482, 1, 0
      %v487 = vsel %vm246, %v483, 0
      %v488 = vand.u32 %v487, 65535
      %v489 = vshrl.u32 %v487, 16
      %v490 = vcvt.s32.f32 %v488
      %v491 = vcvt.s32.f32 %v489
      %492 = vadd.xlane.f32.xlu0 %v490
      %v493 = vpop.xlane.xlu0 %492
      %494 = vadd.xlane.f32.xlu0 %v491
      %v495 = vpop.xlane.xlu0 %494
      %v496 = vcvt.f32.s32 %v493
      %v497 = vcvt.f32.s32 %v495
      %v498 = vshll.u32 %v497, 16
      %v499 = vadd.s32 %v498, %v496
      %v500 = vsel %vm246, %v484, 0
      %v501 = vand.u32 %v500, 65535
      %v502 = vshrl.u32 %v500, 16
      %v503 = vcvt.s32.f32 %v501
      %v504 = vcvt.s32.f32 %v502
      %505 = vadd.xlane.f32.xlu0 %v503
      %v506 = vpop.xlane.xlu0 %505
      %507 = vadd.xlane.f32.xlu0 %v504
      %v508 = vpop.xlane.xlu0 %507
      %v509 = vcvt.f32.s32 %v506
      %v510 = vcvt.f32.s32 %v508
      %v511 = vshll.u32 %v510, 16
      %v512 = vadd.s32 %v511, %v509
      %v513 = vsel %vm246, %v485, 0
      %v514 = vand.u32 %v513, 65535
      %v515 = vshrl.u32 %v513, 16
      %v516 = vcvt.s32.f32 %v514
      %v517 = vcvt.s32.f32 %v515
      %518 = vadd.xlane.f32.xlu0 %v516
      %v519 = vpop.xlane.xlu0 %518
      %520 = vadd.xlane.f32.xlu0 %v517
      %v521 = vpop.xlane.xlu0 %520
      %v522 = vcvt.f32.s32 %v519
      %v523 = vcvt.f32.s32 %v521
      %v524 = vshll.u32 %v523, 16
      %v525 = vadd.s32 %v524, %v522
      %v526 = vsel %vm246, %v486, 0
      %v527 = vand.u32 %v526, 65535
      %v528 = vshrl.u32 %v526, 16
      %v529 = vcvt.s32.f32 %v527
      %v530 = vcvt.s32.f32 %v528
      %531 = vadd.xlane.f32.xlu0 %v529
      %v532 = vpop.xlane.xlu0 %531
      %533 = vadd.xlane.f32.xlu0 %v530
      %v534 = vpop.xlane.xlu0 %533
      %v535 = vcvt.f32.s32 %v532
      %v536 = vcvt.f32.s32 %v534
      %v537 = vshll.u32 %v536, 16
      %v538 = vadd.s32 %v537, %v535
      %vm539 = vcmp.eq.s32.totalorder %v234, 5
      %vm540 = vcmp.eq.s32.totalorder %v235, 5
      %vm541 = vcmp.eq.s32.totalorder %v236, 5
      %vm542 = vcmp.eq.s32.totalorder %v237, 5
      %v543 = vsel %vm539, 1, 0
      %v544 = vsel %vm540, 1, 0
      %v545 = vsel %vm541, 1, 0
      %v546 = vsel %vm542, 1, 0
      %v547 = vsel %vm246, %v543, 0
      %v548 = vand.u32 %v547, 65535
      %v549 = vshrl.u32 %v547, 16
      %v550 = vcvt.s32.f32 %v548
      %v551 = vcvt.s32.f32 %v549
      %552 = vadd.xlane.f32.xlu0 %v550
      %v553 = vpop.xlane.xlu0 %552
      %554 = vadd.xlane.f32.xlu0 %v551
      %v555 = vpop.xlane.xlu0 %554
      %v556 = vcvt.f32.s32 %v553
      %v557 = vcvt.f32.s32 %v555
      %v558 = vshll.u32 %v557, 16
      %v559 = vadd.s32 %v558, %v556
      %v560 = vsel %vm246, %v544, 0
      %v561 = vand.u32 %v560, 65535
      %v562 = vshrl.u32 %v560, 16
      %v563 = vcvt.s32.f32 %v561
      %v564 = vcvt.s32.f32 %v562
      %565 = vadd.xlane.f32.xlu0 %v563
      %v566 = vpop.xlane.xlu0 %565
      %567 = vadd.xlane.f32.xlu0 %v564
      %v568 = vpop.xlane.xlu0 %567
      %v569 = vcvt.f32.s32 %v566
      %v570 = vcvt.f32.s32 %v568
      %v571 = vshll.u32 %v570, 16
      %v572 = vadd.s32 %v571, %v569
      %v573 = vsel %vm246, %v545, 0
      %v574 = vand.u32 %v573, 65535
      %v575 = vshrl.u32 %v573, 16
      %v576 = vcvt.s32.f32 %v574
      %v577 = vcvt.s32.f32 %v575
      %578 = vadd.xlane.f32.xlu0 %v576
      %v579 = vpop.xlane.xlu0 %578
      %580 = vadd.xlane.f32.xlu0 %v577
      %v581 = vpop.xlane.xlu0 %580
      %v582 = vcvt.f32.s32 %v579
      %v583 = vcvt.f32.s32 %v581
      %v584 = vshll.u32 %v583, 16
      %v585 = vadd.s32 %v584, %v582
      %v586 = vsel %vm246, %v546, 0
      %v587 = vand.u32 %v586, 65535
      %v588 = vshrl.u32 %v586, 16
      %v589 = vcvt.s32.f32 %v587
      %v590 = vcvt.s32.f32 %v588
      %591 = vadd.xlane.f32.xlu0 %v589
      %v592 = vpop.xlane.xlu0 %591
      %593 = vadd.xlane.f32.xlu0 %v590
      %v594 = vpop.xlane.xlu0 %593
      %v595 = vcvt.f32.s32 %v592
      %v596 = vcvt.f32.s32 %v594
      %v597 = vshll.u32 %v596, 16
      %v598 = vadd.s32 %v597, %v595
      %vm599 = vcmp.eq.s32.totalorder %v234, 6
      %vm600 = vcmp.eq.s32.totalorder %v235, 6
      %vm601 = vcmp.eq.s32.totalorder %v236, 6
      %vm602 = vcmp.eq.s32.totalorder %v237, 6
      %v603 = vsel %vm599, 1, 0
      %v604 = vsel %vm600, 1, 0
      %v605 = vsel %vm601, 1, 0
      %v606 = vsel %vm602, 1, 0
      %v607 = vsel %vm246, %v603, 0
      %v608 = vand.u32 %v607, 65535
      %v609 = vshrl.u32 %v607, 16
      %v610 = vcvt.s32.f32 %v608
      %v611 = vcvt.s32.f32 %v609
      %612 = vadd.xlane.f32.xlu0 %v610
      %v613 = vpop.xlane.xlu0 %612
      %614 = vadd.xlane.f32.xlu0 %v611
      %v615 = vpop.xlane.xlu0 %614
      %v616 = vcvt.f32.s32 %v613
      %v617 = vcvt.f32.s32 %v615
      %v618 = vshll.u32 %v617, 16
      %v619 = vadd.s32 %v618, %v616
      %v620 = vsel %vm246, %v604, 0
      %v621 = vand.u32 %v620, 65535
      %v622 = vshrl.u32 %v620, 16
      %v623 = vcvt.s32.f32 %v621
      %v624 = vcvt.s32.f32 %v622
      %625 = vadd.xlane.f32.xlu0 %v623
      %v626 = vpop.xlane.xlu0 %625
      %627 = vadd.xlane.f32.xlu0 %v624
      %v628 = vpop.xlane.xlu0 %627
      %v629 = vcvt.f32.s32 %v626
      %v630 = vcvt.f32.s32 %v628
      %v631 = vshll.u32 %v630, 16
      %v632 = vadd.s32 %v631, %v629
      %v633 = vsel %vm246, %v605, 0
      %v634 = vand.u32 %v633, 65535
      %v635 = vshrl.u32 %v633, 16
      %v636 = vcvt.s32.f32 %v634
      %v637 = vcvt.s32.f32 %v635
      %638 = vadd.xlane.f32.xlu0 %v636
      %v639 = vpop.xlane.xlu0 %638
      %640 = vadd.xlane.f32.xlu0 %v637
      %v641 = vpop.xlane.xlu0 %640
      %v642 = vcvt.f32.s32 %v639
      %v643 = vcvt.f32.s32 %v641
      %v644 = vshll.u32 %v643, 16
      %v645 = vadd.s32 %v644, %v642
      %v646 = vsel %vm246, %v606, 0
      %v647 = vand.u32 %v646, 65535
      %v648 = vshrl.u32 %v646, 16
      %v649 = vcvt.s32.f32 %v647
      %v650 = vcvt.s32.f32 %v648
      %651 = vadd.xlane.f32.xlu0 %v649
      %v652 = vpop.xlane.xlu0 %651
      %653 = vadd.xlane.f32.xlu0 %v650
      %v654 = vpop.xlane.xlu0 %653
      %v655 = vcvt.f32.s32 %v652
      %v656 = vcvt.f32.s32 %v654
      %v657 = vshll.u32 %v656, 16
      %v658 = vadd.s32 %v657, %v655
      %vm659 = vcmp.eq.s32.totalorder %v234, 7
      %vm660 = vcmp.eq.s32.totalorder %v235, 7
      %vm661 = vcmp.eq.s32.totalorder %v236, 7
      %vm662 = vcmp.eq.s32.totalorder %v237, 7
      %v663 = vsel %vm659, 1, 0
      %v664 = vsel %vm660, 1, 0
      %v665 = vsel %vm661, 1, 0
      %v666 = vsel %vm662, 1, 0
      %v667 = vsel %vm246, %v663, 0
      %v668 = vand.u32 %v667, 65535
      %v669 = vshrl.u32 %v667, 16
      %v670 = vcvt.s32.f32 %v668
      %v671 = vcvt.s32.f32 %v669
      %672 = vadd.xlane.f32.xlu0 %v670
      %v673 = vpop.xlane.xlu0 %672
      %674 = vadd.xlane.f32.xlu0 %v671
      %v675 = vpop.xlane.xlu0 %674
      %v676 = vcvt.f32.s32 %v673
      %v677 = vcvt.f32.s32 %v675
      %v678 = vshll.u32 %v677, 16
      %v679 = vadd.s32 %v678, %v676
      %v680 = vsel %vm246, %v664, 0
      %v681 = vand.u32 %v680, 65535
      %v682 = vshrl.u32 %v680, 16
      %v683 = vcvt.s32.f32 %v681
      %v684 = vcvt.s32.f32 %v682
      %685 = vadd.xlane.f32.xlu0 %v683
      %v686 = vpop.xlane.xlu0 %685
      %687 = vadd.xlane.f32.xlu0 %v684
      %v688 = vpop.xlane.xlu0 %687
      %v689 = vcvt.f32.s32 %v686
      %v690 = vcvt.f32.s32 %v688
      %v691 = vshll.u32 %v690, 16
      %v692 = vadd.s32 %v691, %v689
      %v693 = vsel %vm246, %v665, 0
      %v694 = vand.u32 %v693, 65535
      %v695 = vshrl.u32 %v693, 16
      %v696 = vcvt.s32.f32 %v694
      %v697 = vcvt.s32.f32 %v695
      %698 = vadd.xlane.f32.xlu0 %v696
      %v699 = vpop.xlane.xlu0 %698
      %700 = vadd.xlane.f32.xlu0 %v697
      %v701 = vpop.xlane.xlu0 %700
      %v702 = vcvt.f32.s32 %v699
      %v703 = vcvt.f32.s32 %v701
      %v704 = vshll.u32 %v703, 16
      %v705 = vadd.s32 %v704, %v702
      %v706 = vsel %vm246, %v666, 0
      %v707 = vand.u32 %v706, 65535
      %v708 = vshrl.u32 %v706, 16
      %v709 = vcvt.s32.f32 %v707
      %v710 = vcvt.s32.f32 %v708
      %711 = vadd.xlane.f32.xlu0 %v709
      %v712 = vpop.xlane.xlu0 %711
      %713 = vadd.xlane.f32.xlu0 %v710
      %v714 = vpop.xlane.xlu0 %713
      %v715 = vcvt.f32.s32 %v712
      %v716 = vcvt.f32.s32 %v714
      %v717 = vshll.u32 %v716, 16
      %v718 = vadd.s32 %v717, %v715
      %vm719 = vcmp.eq.s32.totalorder %v234, 8
      %vm720 = vcmp.eq.s32.totalorder %v235, 8
      %vm721 = vcmp.eq.s32.totalorder %v236, 8
      %vm722 = vcmp.eq.s32.totalorder %v237, 8
      %v723 = vsel %vm719, 1, 0
      %v724 = vsel %vm720, 1, 0
      %v725 = vsel %vm721, 1, 0
      %v726 = vsel %vm722, 1, 0
      %v727 = vsel %vm246, %v723, 0
      %v728 = vand.u32 %v727, 65535
      %v729 = vshrl.u32 %v727, 16
      %v730 = vcvt.s32.f32 %v728
      %v731 = vcvt.s32.f32 %v729
      %732 = vadd.xlane.f32.xlu0 %v730
      %v733 = vpop.xlane.xlu0 %732
      %734 = vadd.xlane.f32.xlu0 %v731
      %v735 = vpop.xlane.xlu0 %734
      %v736 = vcvt.f32.s32 %v733
      %v737 = vcvt.f32.s32 %v735
      %v738 = vshll.u32 %v737, 16
      %v739 = vadd.s32 %v738, %v736
      %v740 = vsel %vm246, %v724, 0
      %v741 = vand.u32 %v740, 65535
      %v742 = vshrl.u32 %v740, 16
      %v743 = vcvt.s32.f32 %v741
      %v744 = vcvt.s32.f32 %v742
      %745 = vadd.xlane.f32.xlu0 %v743
      %v746 = vpop.xlane.xlu0 %745
      %747 = vadd.xlane.f32.xlu0 %v744
      %v748 = vpop.xlane.xlu0 %747
      %v749 = vcvt.f32.s32 %v746
      %v750 = vcvt.f32.s32 %v748
      %v751 = vshll.u32 %v750, 16
      %v752 = vadd.s32 %v751, %v749
      %v753 = vsel %vm246, %v725, 0
      %v754 = vand.u32 %v753, 65535
      %v755 = vshrl.u32 %v753, 16
      %v756 = vcvt.s32.f32 %v754
      %v757 = vcvt.s32.f32 %v755
      %758 = vadd.xlane.f32.xlu0 %v756
      %v759 = vpop.xlane.xlu0 %758
      %760 = vadd.xlane.f32.xlu0 %v757
      %v761 = vpop.xlane.xlu0 %760
      %v762 = vcvt.f32.s32 %v759
      %v763 = vcvt.f32.s32 %v761
      %v764 = vshll.u32 %v763, 16
      %v765 = vadd.s32 %v764, %v762
      %v766 = vsel %vm246, %v726, 0
      %v767 = vand.u32 %v766, 65535
      %v768 = vshrl.u32 %v766, 16
      %v769 = vcvt.s32.f32 %v767
      %v770 = vcvt.s32.f32 %v768
      %771 = vadd.xlane.f32.xlu0 %v769
      %v772 = vpop.xlane.xlu0 %771
      %773 = vadd.xlane.f32.xlu0 %v770
      %v774 = vpop.xlane.xlu0 %773
      %v775 = vcvt.f32.s32 %v772
      %v776 = vcvt.f32.s32 %v774
      %v777 = vshll.u32 %v776, 16
      %v778 = vadd.s32 %v777, %v775
      %vm779 = vcmp.eq.s32.totalorder %v234, 9
      %vm780 = vcmp.eq.s32.totalorder %v235, 9
      %vm781 = vcmp.eq.s32.totalorder %v236, 9
      %vm782 = vcmp.eq.s32.totalorder %v237, 9
      %v783 = vsel %vm779, 1, 0
      %v784 = vsel %vm780, 1, 0
      %v785 = vsel %vm781, 1, 0
      %v786 = vsel %vm782, 1, 0
      %v787 = vsel %vm246, %v783, 0
      %v788 = vand.u32 %v787, 65535
      %v789 = vshrl.u32 %v787, 16
      %v790 = vcvt.s32.f32 %v788
      %v791 = vcvt.s32.f32 %v789
      %792 = vadd.xlane.f32.xlu0 %v790
      %v793 = vpop.xlane.xlu0 %792
      %794 = vadd.xlane.f32.xlu0 %v791
      %v795 = vpop.xlane.xlu0 %794
      %v796 = vcvt.f32.s32 %v793
      %v797 = vcvt.f32.s32 %v795
      %v798 = vshll.u32 %v797, 16
      %v799 = vadd.s32 %v798, %v796
      %v800 = vsel %vm246, %v784, 0
      %v801 = vand.u32 %v800, 65535
      %v802 = vshrl.u32 %v800, 16
      %v803 = vcvt.s32.f32 %v801
      %v804 = vcvt.s32.f32 %v802
      %805 = vadd.xlane.f32.xlu0 %v803
      %v806 = vpop.xlane.xlu0 %805
      %807 = vadd.xlane.f32.xlu0 %v804
      %v808 = vpop.xlane.xlu0 %807
      %v809 = vcvt.f32.s32 %v806
      %v810 = vcvt.f32.s32 %v808
      %v811 = vshll.u32 %v810, 16
      %v812 = vadd.s32 %v811, %v809
      %v813 = vsel %vm246, %v785, 0
      %v814 = vand.u32 %v813, 65535
      %v815 = vshrl.u32 %v813, 16
      %v816 = vcvt.s32.f32 %v814
      %v817 = vcvt.s32.f32 %v815
      %818 = vadd.xlane.f32.xlu0 %v816
      %v819 = vpop.xlane.xlu0 %818
      %820 = vadd.xlane.f32.xlu0 %v817
      %v821 = vpop.xlane.xlu0 %820
      %v822 = vcvt.f32.s32 %v819
      %v823 = vcvt.f32.s32 %v821
      %v824 = vshll.u32 %v823, 16
      %v825 = vadd.s32 %v824, %v822
      %v826 = vsel %vm246, %v786, 0
      %v827 = vand.u32 %v826, 65535
      %v828 = vshrl.u32 %v826, 16
      %v829 = vcvt.s32.f32 %v827
      %v830 = vcvt.s32.f32 %v828
      %831 = vadd.xlane.f32.xlu0 %v829
      %v832 = vpop.xlane.xlu0 %831
      %833 = vadd.xlane.f32.xlu0 %v830
      %v834 = vpop.xlane.xlu0 %833
      %v835 = vcvt.f32.s32 %v832
      %v836 = vcvt.f32.s32 %v834
      %v837 = vshll.u32 %v836, 16
      %v838 = vadd.s32 %v837, %v835
      %vm839 = vcmp.eq.s32.totalorder %v234, 10
      %vm840 = vcmp.eq.s32.totalorder %v235, 10
      %vm841 = vcmp.eq.s32.totalorder %v236, 10
      %vm842 = vcmp.eq.s32.totalorder %v237, 10
      %v843 = vsel %vm839, 1, 0
      %v844 = vsel %vm840, 1, 0
      %v845 = vsel %vm841, 1, 0
      %v846 = vsel %vm842, 1, 0
      %v847 = vsel %vm246, %v843, 0
      %v848 = vand.u32 %v847, 65535
      %v849 = vshrl.u32 %v847, 16
      %v850 = vcvt.s32.f32 %v848
      %v851 = vcvt.s32.f32 %v849
      %852 = vadd.xlane.f32.xlu0 %v850
      %v853 = vpop.xlane.xlu0 %852
      %854 = vadd.xlane.f32.xlu0 %v851
      %v855 = vpop.xlane.xlu0 %854
      %v856 = vcvt.f32.s32 %v853
      %v857 = vcvt.f32.s32 %v855
      %v858 = vshll.u32 %v857, 16
      %v859 = vadd.s32 %v858, %v856
      %v860 = vsel %vm246, %v844, 0
      %v861 = vand.u32 %v860, 65535
      %v862 = vshrl.u32 %v860, 16
      %v863 = vcvt.s32.f32 %v861
      %v864 = vcvt.s32.f32 %v862
      %865 = vadd.xlane.f32.xlu0 %v863
      %v866 = vpop.xlane.xlu0 %865
      %867 = vadd.xlane.f32.xlu0 %v864
      %v868 = vpop.xlane.xlu0 %867
      %v869 = vcvt.f32.s32 %v866
      %v870 = vcvt.f32.s32 %v868
      %v871 = vshll.u32 %v870, 16
      %v872 = vadd.s32 %v871, %v869
      %v873 = vsel %vm246, %v845, 0
      %v874 = vand.u32 %v873, 65535
      %v875 = vshrl.u32 %v873, 16
      %v876 = vcvt.s32.f32 %v874
      %v877 = vcvt.s32.f32 %v875
      %878 = vadd.xlane.f32.xlu0 %v876
      %v879 = vpop.xlane.xlu0 %878
      %880 = vadd.xlane.f32.xlu0 %v877
      %v881 = vpop.xlane.xlu0 %880
      %v882 = vcvt.f32.s32 %v879
      %v883 = vcvt.f32.s32 %v881
      %v884 = vshll.u32 %v883, 16
      %v885 = vadd.s32 %v884, %v882
      %v886 = vsel %vm246, %v846, 0
      %v887 = vand.u32 %v886, 65535
      %v888 = vshrl.u32 %v886, 16
      %v889 = vcvt.s32.f32 %v887
      %v890 = vcvt.s32.f32 %v888
      %891 = vadd.xlane.f32.xlu0 %v889
      %v892 = vpop.xlane.xlu0 %891
      %893 = vadd.xlane.f32.xlu0 %v890
      %v894 = vpop.xlane.xlu0 %893
      %v895 = vcvt.f32.s32 %v892
      %v896 = vcvt.f32.s32 %v894
      %v897 = vshll.u32 %v896, 16
      %v898 = vadd.s32 %v897, %v895
      %vm899 = vcmask 7168
      %v900 = vsel %vm899, %v259, %v319
      %v901 = vsel %vm899, %v272, %v332
      %v902 = vsel %vm899, %v285, %v345
      %v903 = vsel %vm899, %v298, %v358
      %vm904 = vcmask 15360
      %v905 = vsel %vm904, %v900, %v379
      %v906 = vsel %vm904, %v901, %v392
      %v907 = vsel %vm904, %v902, %v405
      %v908 = vsel %vm904, %v903, %v418
      %vm909 = vcmask 23552
      %v910 = vsel %vm909, %v905, %v439
      %v911 = vsel %vm909, %v906, %v452
      %v912 = vsel %vm909, %v907, %v465
      %v913 = vsel %vm909, %v908, %v478
      %vm914 = vcmask 31744
      %v915 = vsel %vm914, %v910, %v499
      %v916 = vsel %vm914, %v911, %v512
      %v917 = vsel %vm914, %v912, %v525
      %v918 = vsel %vm914, %v913, %v538
      %vm919 = vcmask 39936
      %v920 = vsel %vm919, %v915, %v559
      %v921 = vsel %vm919, %v916, %v572
      %v922 = vsel %vm919, %v917, %v585
      %v923 = vsel %vm919, %v918, %v598
      %vm924 = vcmask 48128
      %v925 = vsel %vm924, %v920, %v619
      %v926 = vsel %vm924, %v921, %v632
      %v927 = vsel %vm924, %v922, %v645
      %v928 = vsel %vm924, %v923, %v658
      %vm929 = vcmask 56320
      %v930 = vsel %vm929, %v925, %v679
      %v931 = vsel %vm929, %v926, %v692
      %v932 = vsel %vm929, %v927, %v705
      %v933 = vsel %vm929, %v928, %v718
      %vm934 = vcmask 64512
      %v935 = vsel %vm934, %v930, %v739
      %v936 = vsel %vm934, %v931, %v752
      %v937 = vsel %vm934, %v932, %v765
      %v938 = vsel %vm934, %v933, %v778
      %vm939 = vcmask 72704
      %v940 = vsel %vm939, %v935, %v799
      %v941 = vsel %vm939, %v936, %v812
      %v942 = vsel %vm939, %v937, %v825
      %v943 = vsel %vm939, %v938, %v838
      %vm944 = vcmask 80896
      %v945 = vsel %vm944, %v940, %v859
      %v946 = vsel %vm944, %v941, %v872
      %v947 = vsel %vm944, %v942, %v885
      %v948 = vsel %vm944, %v943, %v898
      %v949 = vcvt.s32.f32 %v945
      %v950 = vcvt.s32.f32 %v946
      %v951 = vcvt.s32.f32 %v947
      %v952 = vcvt.s32.f32 %v948
      %v953 = vld [vmem:[%s191] sm:$0xff]
      %v954 = vld [vmem:[%s191 + $0x8] sm:$0xff]
      %v955 = vld [vmem:[%s191 + $0x10] sm:$0xff]
      %v956 = vld [vmem:[%s191 + $0x18] sm:$0xff]
      %958 = vset.pattern.permute.xlu0 0
      %959 = vperm.xlu0 %958, %v953
      %v960 = vpop.permute.xlu0 %959
      %963 = vset.pattern.permute.xlu0 0
      %964 = vperm.xlu0 %963, %v954
      %v965 = vpop.permute.xlu0 %964
      %968 = vset.pattern.permute.xlu0 0
      %969 = vperm.xlu0 %968, %v955
      %v970 = vpop.permute.xlu0 %969
      %973 = vset.pattern.permute.xlu0 0
      %974 = vperm.xlu0 %973, %v956
      %v975 = vpop.permute.xlu0 %974
      %v977 = vmul.f32 %v949, %v960
      %v978 = vmul.f32 %v950, %v965
      %v979 = vmul.f32 %v951, %v970
      %v980 = vmul.f32 %v952, %v975
      %v981 = vadd.f32 %v977, 1e-05
      %v982 = vadd.f32 %v978, 1e-05
      %v983 = vadd.f32 %v979, 1e-05
      %v984 = vadd.f32 %v980, 1e-05
      %v985 = vlog2.pop %v981
      %v986 = vmul.f32 %v985, 0.6931472
      %v987 = vlog2.pop %v982
      %v988 = vmul.f32 %v987, 0.6931472
      %v989 = vlog2.pop %v983
      %v990 = vmul.f32 %v989, 0.6931472
      %v991 = vlog2.pop %v984
      %v992 = vmul.f32 %v991, 0.6931472
      %vm993 = vcmask 89088
      %994 = vst.msk [vmem:[%s204] sm:$0xff] %vm993, %v986
      %995 = vst.msk [vmem:[%s204 + $0x8] sm:$0xff] %vm993, %v988
      %996 = vst.msk [vmem:[%s204 + $0x10] sm:$0xff] %vm993, %v990
      %997 = vst.msk [vmem:[%s204 + $0x18] sm:$0xff] %vm993, %v992
      %p998 = scmp.lt.s32.totalorder %s14, 1
      %s999 = scalar_select %p998, %s14, 1
      %s1000 = smul.addr %s999, 4
      %s1001 = smul.addr %s1000, 8
      %s1002 = scalar_lea.vmem %s3, %s1001
      // Predicated region
      $region33: #{tpu_custom_call.1} parent=31 // pred_check
        %p1003 = pneg %p110
      $region34: #{tpu_custom_call.1} parent=31 // pred_check_branch
        %1005 = sbr.rel (%p1003) target = $region36
      $region35: #{tpu_custom_call.1} parent=31 // pred_region
        _
      $region36: #{tpu_custom_call.1} parent=31 // pred_fallthru
        _
    $region32: #{tpu_custom_call.1} parent=5 // pred_fallthru
      _
    %p1006 = scmp.le.s32.totalorder 2, %s9
    // Predicated region
    $region37: #{tpu_custom_call.1} parent=5 // pred_check
      %p1007 = pneg %p1006
    $region38: #{tpu_custom_call.1} parent=5 // pred_check_branch
      %1009 = sbr.rel (%p1007) target = $region40
    $region39: #{tpu_custom_call.1} parent=5 // pred_region
      %s1010 = ssub.s32 %s9, 2
      // Predicated region
      $region41: #{tpu_custom_call.1} parent=39 // pred_check
        %p1011 = pneg %p116
      $region42: #{tpu_custom_call.1} parent=39 // pred_check_branch
        %1013 = sbr.rel (%p1011) target = $region44
      $region43: #{tpu_custom_call.1} parent=39 // pred_region
        %p1014 = scmp.lt.s32.totalorder %s15, 1
        %s1015 = scalar_select %p1014, %s15, 1
        %s1016 = smul.addr %s1015, 4
        %s1017 = smul.addr %s1016, 8
        %s1018 = scalar_lea.vmem %s3, %s1017
      $region44: #{tpu_custom_call.1} parent=39 // pred_fallthru
        _
    $region40: #{tpu_custom_call.1} parent=5 // pred_fallthru
      _
  $region6: #{tpu_custom_call.1} parent=0 // loop_footer
    %s13 = sadd.s32 1, %s9
  $region7: #{tpu_custom_call.1} parent=0 // loop_footer_branch
    %8 = sbr.rel target = $region3
  $region8: #{tpu_custom_call.1} parent=0 // loop_exit
    _

</llo_original>
